<compile_context>
chip_gen: v7x
topology: tpu7x:2x2x1
jax: 0.10.0
libtpu: 0.0.40
codegen_flags: <defaults>
</compile_context>

<pallas_src>
import jax
import jax.numpy as jnp
from jax.experimental import pallas as pl
from jax.experimental.pallas import tpu as pltpu

_LANE = 128


def _prelu_kernel(w_ref, x_ref, o_ref):
    # w_ref: (1,) f32 slope in SMEM.  x_ref / o_ref: (row_tile, width) VMEM tile.
    x = x_ref[...]
    w = w_ref[0].astype(x_ref.dtype)  # dtype-robust: no f32 promotion on bf16
    # Single select+mul on the VPU; the kernel is DMA/vld/vst-bound so this
    # co-issues essentially for free.  No wrapper-side pre-scaling.
    o_ref[...] = jnp.where(x < 0, w * x, x)


def _pick_width(n: int) -> int:
    """Widest lane-dense last dim (multiple of 128) dividing n exactly, else 128."""
    for w in (4096, 2048, 1024, 512, 256, 128):
        if n % w == 0:
            return w
    return _LANE


def _tpu_generation() -> int:
    try:
        kind = jax.devices()[0].device_kind.lower()
    except Exception:
        return 0
    for gen in (7, 6, 5, 4):
        if f"v{gen}" in kind:
            return gen
    return 0


def _tiling_params():
    """Returns (target_block_bytes, vmem_limit_bytes or None), generation-aware."""
    gen = _tpu_generation()
    if gen >= 7:
        # v7x: ~3.2 TB/s HBM -> 8 MiB blocks keep the ~0.35us/step overhead <5%.
        # 2 bufs x (in+out) x 8 MiB = 32 MiB sits at the scoped-VMEM default, so
        # raise the limit explicitly (physical VMEM is 64 MiB).
        return 8 * 1024 * 1024, 48 << 20
    if gen == 6:
        # v6e: 4 MiB blocks; double-buffered in+out = 16 MiB < 32 MiB default.
        return 4 * 1024 * 1024, None
    # v5e (16 MiB scoped default) or unknown chip: conservative 2 MiB blocks.
    return 2 * 1024 * 1024, None


def _round_up(x: int, m: int) -> int:
    return (x + m - 1) // m * m


def prelu(x: jax.Array, weight: jax.Array) -> jax.Array:
    """Elementwise PReLU with a scalar slope: out = x if x >= 0 else weight * x."""
    weight = jnp.asarray(weight, dtype=jnp.float32).reshape(-1)
    if weight.shape[0] != 1:
        # TODO(synk): per-channel PReLU (num_parameters=C) needs a channel-preserving layout.
        raise ValueError("only scalar-weight PReLU is supported (weight.size must be 1)")

    orig_shape = x.shape
    dtype = x.dtype
    flat = x.reshape(-1)  # contiguous view; free
    n = flat.shape[0]
    if n == 0:
        return x

    width = _pick_width(n)
    n_main = (n // width) * width

    if n_main == 0:
        # Fewer than 128 elements total: not worth a DMA pipeline.
        w = weight[0].astype(dtype)
        return jnp.where(x < 0, w * x, x)

    slab = flat[:n_main].reshape(-1, width)  # [rows, width], width % 128 == 0
    rows = slab.shape[0]

    itemsize = jnp.dtype(dtype).itemsize
    sublane = max(8, 32 // itemsize)  # sublane packing: 8 f32, 16 bf16, 32 int8/fp8
    block_bytes, vmem_limit = _tiling_params()
    row_tile = max(sublane, (block_bytes // (width * itemsize)) // sublane * sublane)

    if rows <= row_tile:
        row_tile = rows  # single full-extent block -> grid of 1
    else:
        # Even out block sizes across the grid: avoids a full-block + sliver
        # split that would load-imbalance v7x's two TensorCores.
        num_blocks = pl.cdiv(rows, row_tile)
        row_tile = _round_up(pl.cdiv(rows, num_blocks), sublane)

    grid = (pl.cdiv(rows, row_tile),)  # ragged final block masked by Pallas

    cp_kwargs = dict(dimension_semantics=("parallel",))
    # TODO(synk): on v7x, confirm in a trace that both TensorCores stream; if the
    # grid serializes, switch this axis to pltpu.CORE_PARALLEL.
    if vmem_limit is not None:
        cp_kwargs["vmem_limit_bytes"] = vmem_limit

    out_main = pl.pallas_call(
        _prelu_kernel,
        out_shape=jax.ShapeDtypeStruct((rows, width), dtype),
        grid=grid,
        in_specs=[
            pl.BlockSpec(memory_space=pltpu.MemorySpace.SMEM),   # (1,) slope
            pl.BlockSpec((row_tile, width), lambda i: (i, 0)),   # x tile
        ],
        out_specs=pl.BlockSpec((row_tile, width), lambda i: (i, 0)),
        compiler_params=pltpu.CompilerParams(**cp_kwargs),
    )(weight, slab)

    out_flat = out_main.reshape(-1)
    if n_main != n:
        # < width leftover elements: handle directly in the wrapper (no
        # full-array pad + slice round-trip through HBM).
        tail = flat[n_main:]
        w = weight[0].astype(dtype)
        out_flat = jnp.concatenate([out_flat, jnp.where(tail < 0, w * tail, tail)])
    return out_flat.reshape(orig_shape)


if __name__ == "__main__":
    key = jax.random.PRNGKey(0)

    # Deterministic parameter init, same as PReLU.__init__(init_weight=0.25).
    weight = jnp.array([0.25], dtype=jnp.float32)

    # Matches PyTorch NCHW conv-style input: batch=2, channels=4, spatial=16x16.
    x = jax.random.normal(key, (2, 4, 16, 16), dtype=jnp.float32)
    out = jax.block_until_ready(prelu(x, weight))
    ref = jnp.where(x < 0, weight[0] * x, x)
    assert out.shape == x.shape and out.dtype == x.dtype
    assert jnp.allclose(out, ref, atol=1e-6), "mismatch vs reference (aligned case)"

    # Ragged element count (exercises the aligned-prefix kernel + wrapper tail).
    x2 = jax.random.normal(jax.random.PRNGKey(1), (3, 5, 67), dtype=jnp.float32)
    out2 = jax.block_until_ready(prelu(x2, weight))
    ref2 = jnp.where(x2 < 0, weight[0] * x2, x2)
    assert out2.shape == x2.shape and out2.dtype == x2.dtype
    assert jnp.allclose(out2, ref2, atol=1e-6), "mismatch vs reference (ragged case)"

    # bf16 input (exercises the dtype-robust slope cast, no f32 promotion).
    x3 = jax.random.normal(jax.random.PRNGKey(2), (4, 8, 64), dtype=jnp.bfloat16)
    out3 = jax.block_until_ready(prelu(x3, weight))
    ref3 = jnp.where(x3 < 0, weight[0].astype(jnp.bfloat16) * x3, x3)
    assert out3.shape == x3.shape and out3.dtype == jnp.bfloat16
    assert jnp.allclose(out3.astype(jnp.float32), ref3.astype(jnp.float32), atol=1e-2), \
        "mismatch vs reference (bf16 case)"

    print("KERNEL_OK")
</pallas_src>

<mosaic_0001>
module attributes {stable_mosaic.version = 11 : i64} {
  func.func @_prelu_kernel(%arg0: i32, %arg1: memref<1xf32, #tpu.memory_space<smem>>, %arg2: memref<1x2048xf32, #tpu.memory_space<vmem>>, %arg3: memref<1x2048xf32, #tpu.memory_space<vmem>>) attributes {dimension_semantics = [#tpu.dimension_semantics<parallel>], iteration_bounds = array<i64: 1>, scalar_prefetch = 0 : i64, scratch_operands = 0 : i64, tpu.core_type = #tpu.core_type<tc>, window_params = [{transform_indices = @transform_0, window_bounds = array<i64: 1>}, {transform_indices = @transform_1, window_bounds = array<i64: 1, 2048>}, {transform_indices = @transform_2, window_bounds = array<i64: 1, 2048>}]} {
    %c0 = arith.constant 0 : index
    %c0_0 = arith.constant 0 : index
    %0 = vector.load %arg2[%c0, %c0_0] : memref<1x2048xf32, #tpu.memory_space<vmem>>, vector<1x2048xf32>
    %c0_1 = arith.constant 0 : index
    %1 = memref.load %arg1[%c0_1] : memref<1xf32, #tpu.memory_space<smem>>
    %cst = arith.constant 0.000000e+00 : f32
    %2 = vector.broadcast %cst : f32 to vector<1x2048xf32>
    %3 = arith.cmpf olt, %0, %2 : vector<1x2048xf32>
    %4 = vector.broadcast %1 : f32 to vector<1x2048xf32>
    %5 = arith.mulf %4, %0 : vector<1x2048xf32>
    %6 = arith.select %3, %5, %0 : vector<1x2048xi1>, vector<1x2048xf32>
    %c0_2 = arith.constant 0 : index
    %c0_3 = arith.constant 0 : index
    %7 = vector.load %arg3[%c0_2, %c0_3] : memref<1x2048xf32, #tpu.memory_space<vmem>>, vector<1x2048xf32>
    tpu.vector_store %arg3[%c0_2, %c0_3], %6 {strides = array<i32>} : memref<1x2048xf32, #tpu.memory_space<vmem>>, vector<1x2048xf32>,
    return
  }
  func.func @transform_0(%arg0: i32) -> i32 {
    %c0_i32 = arith.constant 0 : i32
    %c0_i32_0 = arith.constant 0 : i32
    return %c0_i32 : i32
  }
  func.func @transform_1(%arg0: i32) -> (i32, i32) {
    %c0_i32 = arith.constant 0 : i32
    %c0_i32_0 = arith.constant 0 : i32
    return %arg0, %c0_i32 : i32, i32
  }
  func.func @transform_2(%arg0: i32) -> (i32, i32) {
    %c0_i32 = arith.constant 0 : i32
    %c0_i32_0 = arith.constant 0 : i32
    return %arg0, %c0_i32 : i32, i32
  }
}

</mosaic_0001>

<llo_original>
// kernel: tpu_custom_call.1
$region0: #{tpu_custom_call.1}
  #allocation0 [shape = 'u32[]', space=smem, size = 0x4, offset = 0x4, fixed_abs, tag = 'smem constant byte address 0x4 - core index']
  #allocation1 [shape = 'u32[144,128]{1,0:T(1,128)}', space=vmem, size = 0x12000, scoped, tag = 'internal scratch']
  #allocation2 [shape = 'f32[1]{0:T(128)S(6)}', space=smem, size = 0x200, scoped, tag = 'scoped memory for tpu_custom_call.1']
  %s0 = inlined_call_operand.<no memory space> [shape: f32[1], index: 0, kind: input, shape index: {}]
  %s1 = inlined_call_operand.hbm [shape: f32[1,2048], index: 1, kind: input, shape index: {}]
  %s2 = inlined_call_operand.hbm [shape: f32[1,2048], index: 2, kind: output, shape index: {}]
  %s3 = sld [smem:[#allocation0]]
  $region22: #{tpu_custom_call.1} parent=0
    _
  %s5 = ssub.s32 1, %s3
  %s6 = scalar_select 0, %s5, %s3
  %7 = sst [smem:[#allocation2]] %s0
  $region1: #{tpu_custom_call.1} parent=0
    #allocation3 [shape = 'u8[8192]{0}', space=vmem, size = 0x2000, scoped, tag = 'input window, operand 1, single buffered']
    #allocation4 [shape = 's32[1]{0}', space=sflag, size = 0x4, scoped, tag = 'scoped memory for tpu_custom_call.1']
    #allocation5 [shape = 's32[1]{0}', space=sflag, size = 0x4, scoped, tag = 'scoped memory for tpu_custom_call.1']
    #allocation6 [shape = 'u8[8192]{0}', space=vmem, size = 0x2000, scoped, tag = 'output window, operand 0, single buffered']
    %8 = vsyncpa [#allocation4], 0
    %9 = vsyncpa [#allocation5], 0
    // Predicated region
    $region2: #{tpu_custom_call.1} parent=1 // pred_check
      _
    $region3: #{tpu_custom_call.1} parent=1 // pred_check_branch
      %11 = sbr.rel (0) target = $region5
    $region4: #{tpu_custom_call.1} parent=1 // pred_region
      _
    $region5: #{tpu_custom_call.1} parent=1 // pred_fallthru
      _
    // Predicated region
    $region6: #{tpu_custom_call.1} parent=1 // pred_check
      _
    $region7: #{tpu_custom_call.1} parent=1 // pred_check_branch
      %13 = sbr.rel (0) target = $region9
    $region8: #{tpu_custom_call.1} parent=1 // pred_region
      %s15 = ssub.s32 256, 256
      %16 = vsyncadd [#allocation4], %s15
      %s18 = sshll.u32 [#allocation3], 4
      %s19 = int_to_ptr.vmem [resolvable:$true] %s18
      %21 = dma.hbm_to_vmem [thread:$0]  %s1, 256, %s19, [#allocation4]
    $region9: #{tpu_custom_call.1} parent=1 // pred_fallthru
      _
    // Predicated region
    $region10: #{tpu_custom_call.1} parent=1 // pred_check
      _
    $region11: #{tpu_custom_call.1} parent=1 // pred_check_branch
      %23 = sbr.rel (0) target = $region13
    $region12: #{tpu_custom_call.1} parent=1 // pred_region
      %24 = dma.done [#allocation4], 256
    $region13: #{tpu_custom_call.1} parent=1 // pred_fallthru
      _
    %v25 = vld [vmem:[#allocation3] sm:$0xff]
    %v26 = vld [vmem:[#allocation3 + $0x8] sm:$0xff]
    %s27 = sld [smem:[#allocation2]]
    %vm28 = vcmp.lt.f32.partialorder %v25, 0.0
    %vm29 = vcmp.lt.f32.partialorder %v26, 0.0
    %v30 = vstv %s27
    %v31 = vmul.f32 %v30, %v25
    %v32 = vmul.f32 %v30, %v26
    %v33 = vsel %vm28, %v31, %v25
    %v34 = vsel %vm29, %v32, %v26
    %35 = vst [vmem:[#allocation6] sm:$0xff] %v33
    %36 = vst [vmem:[#allocation6 + $0x8] sm:$0xff] %v34
    // Predicated region
    $region14: #{tpu_custom_call.1} parent=1 // pred_check
      _
    $region15: #{tpu_custom_call.1} parent=1 // pred_check_branch
      %38 = sbr.rel (0) target = $region17
    $region16: #{tpu_custom_call.1} parent=1 // pred_region
      %s40 = ssub.s32 256, 256
      %41 = vsyncadd [#allocation5], %s40
      %s43 = sshll.u32 [#allocation6], 4
      %s44 = int_to_ptr.vmem [resolvable:$true] %s43
      %46 = dma.vmem_to_hbm [thread:$0]  %s44, 256, %s2, [#allocation5]
    $region17: #{tpu_custom_call.1} parent=1 // pred_fallthru
      _
    // Predicated region
    $region18: #{tpu_custom_call.1} parent=1 // pred_check
      _
    $region19: #{tpu_custom_call.1} parent=1 // pred_check_branch
      %48 = sbr.rel (0) target = $region21
    $region20: #{tpu_custom_call.1} parent=1 // pred_region
      %49 = dma.done [#allocation5], 256
    $region21: #{tpu_custom_call.1} parent=1 // pred_fallthru
      _
    %50 = vsyncpa [#allocation4], 1
    %51 = vsyncpa [#allocation5], 1

</llo_original>
